<compile_context>
chip_gen: v7x
topology: tpu7x:2x2x1
jax: 0.10.0
libtpu: 0.0.40
codegen_flags: <defaults>
</compile_context>

<pallas_src>
import jax
import jax.numpy as jnp
from jax.experimental import pallas as pl
from jax.experimental.pallas import tpu as pltpu

LANES = 128            # slab width: one full lane group -> unmasked vst
MIN_SPLIT_ROWS = 2048  # ~1 MiB f32: only split a single-block input for 2 TCs above this


def _cdiv(a, b):
    return -(-a // b)


def _round_up(a, b):
    return _cdiv(a, b) * b


def _chip_defaults():
    """Returns (max block rows, two_tensorcores?) based on the TPU generation."""
    try:
        kind = jax.devices()[0].device_kind.lower()
    except Exception:
        kind = ""
    if "7" in kind:         # v7x: ~3.2 TB/s per TC and 2 TCs/chip -> bigger blocks
        return 8192, True   # 4 MiB f32 block
    if "6" in kind:         # v6e: 2 MiB block sits on the 86% roofline plateau
        return 4096, False
    return 2048, False      # v5e & unknown: 1 MiB block is the measured sweet spot


def _poly_mul_kernel(params_ref, x_ref, o_ref):
    """params_ref: SMEM (8,) f32 = [a1,b1,c1,d1,a2,b2,c2,d2]; x/o: VMEM tiles."""
    a1 = params_ref[0]
    b1 = params_ref[1]
    c1 = params_ref[2]
    d1 = params_ref[3]
    a2 = params_ref[4]
    b2 = params_ref[5]
    c2 = params_ref[6]
    d2 = params_ref[7]

    # Upcast in-kernel (VPU has huge slack at the HBM roofline) so bf16 inputs
    # travel as bf16 in HBM.
    x = x_ref[...].astype(jnp.float32)
    # Horner form: a + x*(b + x*(c + x*d))
    p1 = a1 + x * (b1 + x * (c1 + x * d1))
    p2 = a2 + x * (b2 + x * (c2 + x * d2))
    o_ref[...] = (p1 * p2).astype(o_ref.dtype)


def _poly_mul_jnp(x, params):
    """Plain-jnp fallback for empty inputs and the <128-element ragged tail."""
    p = params.astype(jnp.float32)
    xf = x.astype(jnp.float32)
    p1 = p[0] + xf * (p[1] + xf * (p[2] + xf * p[3]))
    p2 = p[4] + xf * (p[5] + xf * (p[6] + xf * p[7]))
    return (p1 * p2).astype(x.dtype)


def _run_slab(slab, params, max_rows, two_core):
    """pallas_call over a contiguous (rows, 128) slab."""
    rows = slab.shape[0]

    # Pick a block/grid split: big blocks to amortize the ~0.35us per-step
    # overhead; on v7x force >=2 balanced steps (and an even step count) so
    # both TensorCores get work.
    if rows <= max_rows:
        nblocks = 2 if (two_core and rows >= MIN_SPLIT_ROWS) else 1
    else:
        nblocks = _cdiv(rows, max_rows)
        if two_core and nblocks % 2:
            nblocks += 1

    if nblocks == 1:
        block_rows = rows  # full-array block (legal even if rows % 8 != 0)
    else:
        block_rows = min(rows, _round_up(_cdiv(rows, nblocks), 8))
    grid = (_cdiv(rows, block_rows),)

    vmem_limit = 32 * 1024 * 1024 if max_rows >= 8192 else None

    return pl.pallas_call(
        _poly_mul_kernel,
        out_shape=jax.ShapeDtypeStruct((rows, LANES), slab.dtype),
        grid_spec=pltpu.PrefetchScalarGridSpec(
            num_scalar_prefetch=0,
            grid=grid,
            in_specs=[
                pl.BlockSpec(memory_space=pltpu.SMEM),                  # 8 scalar params
                pl.BlockSpec((block_rows, LANES), lambda i: (i, 0)),    # x tile
            ],
            out_specs=pl.BlockSpec((block_rows, LANES), lambda i: (i, 0)),
        ),
        compiler_params=pltpu.CompilerParams(
            dimension_semantics=("parallel",),  # shards grid steps over v7x's 2 TCs
            vmem_limit_bytes=vmem_limit,
        ),
    )(params.astype(jnp.float32), slab)


def polynomial_multiplier(x, params):
    """x: any shape (NCHW in the test), any float dtype. params: (8,) scalars."""
    orig_shape = x.shape
    n = x.size
    if n == 0:
        return _poly_mul_jnp(x, params)

    max_rows, two_core = _chip_defaults()
    flat = x.reshape(-1)
    rem = n % LANES

    if rem == 0:
        # Fast path: contiguous reshape only, zero extra HBM copies.
        slab = flat.reshape(-1, LANES)
        out = _run_slab(slab, params, max_rows, two_core)
        return out.reshape(orig_shape)

    aligned = n - rem
    if aligned == 0:
        # Fewer than 128 elements: a kernel launch is not worth it.
        return _poly_mul_jnp(x, params).reshape(orig_shape)

    # Ragged path: kernel on the 128-aligned prefix, plain jnp on the <128
    # element tail.  No whole-tensor jnp.pad / trailing slice (each of those
    # was an extra full HBM pass).
    main = _run_slab(flat[:aligned].reshape(-1, LANES), params, max_rows, two_core)
    tail = _poly_mul_jnp(flat[aligned:], params)
    return jnp.concatenate([main.reshape(-1), tail]).reshape(orig_shape)


def _reference(x, params):
    a1, b1, c1, d1, a2, b2, c2, d2 = [params[i] for i in range(8)]
    p1 = a1 + b1 * x + c1 * x**2 + d1 * x**3
    p2 = a2 + b2 * x + c2 * x**2 + d2 * x**3
    return p1 * p2


if __name__ == "__main__":
    key = jax.random.PRNGKey(0)
    k_x, k_p = jax.random.split(key)

    # Deterministic "parameters" (torch.randn(()) x 8 in the module __init__).
    params = jax.random.normal(k_p, (8,), dtype=jnp.float32)

    # NCHW input consistent with the original module's elementwise forward.
    x = jax.random.normal(k_x, (2, 4, 16, 16), dtype=jnp.float32)

    out = polynomial_multiplier(x, params)
    out = jax.block_until_ready(out)

    ref = _reference(x, params)
    assert out.shape == x.shape and out.dtype == x.dtype
    assert jnp.allclose(out, ref, rtol=1e-5, atol=1e-5), "mismatch vs reference"

    # Exercise the ragged (non-multiple-of-128) path as well.
    x2 = jax.random.normal(k_x, (3, 5, 7, 3), dtype=jnp.float32)  # 315 elements
    out2 = jax.block_until_ready(polynomial_multiplier(x2, params))
    assert jnp.allclose(out2, _reference(x2, params), rtol=1e-5, atol=1e-5), "ragged mismatch"

    print("KERNEL_OK")
</pallas_src>

<mosaic_0001>
module attributes {stable_mosaic.version = 11 : i64} {
  func.func @_poly_mul_kernel(%arg0: i32, %arg1: memref<8xf32, #tpu.memory_space<smem>>, %arg2: memref<16x128xf32, #tpu.memory_space<vmem>>, %arg3: memref<16x128xf32, #tpu.memory_space<vmem>>) attributes {dimension_semantics = [#tpu.dimension_semantics<parallel>], iteration_bounds = array<i64: 1>, scalar_prefetch = 0 : i64, scratch_operands = 0 : i64, tpu.core_type = #tpu.core_type<tc>, window_params = [{transform_indices = @transform_0, window_bounds = array<i64: 8>}, {transform_indices = @transform_1, window_bounds = array<i64: 16, 128>}, {transform_indices = @transform_2, window_bounds = array<i64: 16, 128>}]} {
    %c0 = arith.constant 0 : index
    %0 = memref.load %arg1[%c0] : memref<8xf32, #tpu.memory_space<smem>>
    %c1 = arith.constant 1 : index
    %1 = memref.load %arg1[%c1] : memref<8xf32, #tpu.memory_space<smem>>
    %c2 = arith.constant 2 : index
    %2 = memref.load %arg1[%c2] : memref<8xf32, #tpu.memory_space<smem>>
    %c3 = arith.constant 3 : index
    %3 = memref.load %arg1[%c3] : memref<8xf32, #tpu.memory_space<smem>>
    %c4 = arith.constant 4 : index
    %4 = memref.load %arg1[%c4] : memref<8xf32, #tpu.memory_space<smem>>
    %c5 = arith.constant 5 : index
    %5 = memref.load %arg1[%c5] : memref<8xf32, #tpu.memory_space<smem>>
    %c6 = arith.constant 6 : index
    %6 = memref.load %arg1[%c6] : memref<8xf32, #tpu.memory_space<smem>>
    %c7 = arith.constant 7 : index
    %7 = memref.load %arg1[%c7] : memref<8xf32, #tpu.memory_space<smem>>
    %c0_0 = arith.constant 0 : index
    %c0_1 = arith.constant 0 : index
    %8 = vector.load %arg2[%c0_0, %c0_1] : memref<16x128xf32, #tpu.memory_space<vmem>>, vector<16x128xf32>
    %9 = vector.broadcast %3 : f32 to vector<16x128xf32>
    %10 = arith.mulf %8, %9 : vector<16x128xf32>
    %11 = vector.broadcast %2 : f32 to vector<16x128xf32>
    %12 = arith.addf %11, %10 : vector<16x128xf32>
    %13 = arith.mulf %8, %12 : vector<16x128xf32>
    %14 = vector.broadcast %1 : f32 to vector<16x128xf32>
    %15 = arith.addf %14, %13 : vector<16x128xf32>
    %16 = arith.mulf %8, %15 : vector<16x128xf32>
    %17 = vector.broadcast %0 : f32 to vector<16x128xf32>
    %18 = arith.addf %17, %16 : vector<16x128xf32>
    %19 = vector.broadcast %7 : f32 to vector<16x128xf32>
    %20 = arith.mulf %8, %19 : vector<16x128xf32>
    %21 = vector.broadcast %6 : f32 to vector<16x128xf32>
    %22 = arith.addf %21, %20 : vector<16x128xf32>
    %23 = arith.mulf %8, %22 : vector<16x128xf32>
    %24 = vector.broadcast %5 : f32 to vector<16x128xf32>
    %25 = arith.addf %24, %23 : vector<16x128xf32>
    %26 = arith.mulf %8, %25 : vector<16x128xf32>
    %27 = vector.broadcast %4 : f32 to vector<16x128xf32>
    %28 = arith.addf %27, %26 : vector<16x128xf32>
    %29 = arith.mulf %18, %28 : vector<16x128xf32>
    %c0_2 = arith.constant 0 : index
    %c0_3 = arith.constant 0 : index
    %30 = vector.load %arg3[%c0_2, %c0_3] : memref<16x128xf32, #tpu.memory_space<vmem>>, vector<16x128xf32>
    tpu.vector_store %arg3[%c0_2, %c0_3], %29 {strides = array<i32>} : memref<16x128xf32, #tpu.memory_space<vmem>>, vector<16x128xf32>,
    return
  }
  func.func @transform_0(%arg0: i32) -> i32 {
    %c0_i32 = arith.constant 0 : i32
    %c0_i32_0 = arith.constant 0 : i32
    return %c0_i32 : i32
  }
  func.func @transform_1(%arg0: i32) -> (i32, i32) {
    %c0_i32 = arith.constant 0 : i32
    %c0_i32_0 = arith.constant 0 : i32
    return %arg0, %c0_i32 : i32, i32
  }
  func.func @transform_2(%arg0: i32) -> (i32, i32) {
    %c0_i32 = arith.constant 0 : i32
    %c0_i32_0 = arith.constant 0 : i32
    return %arg0, %c0_i32 : i32, i32
  }
}

</mosaic_0001>

<llo_original>
// kernel: tpu_custom_call.1
$region0: #{tpu_custom_call.1}
  #allocation0 [shape = 'u32[]', space=smem, size = 0x4, offset = 0x4, fixed_abs, tag = 'smem constant byte address 0x4 - core index']
  #allocation1 [shape = 'u32[144,128]{1,0:T(1,128)}', space=vmem, size = 0x12000, scoped, tag = 'internal scratch']
  %s0 = inlined_call_operand.hbm [shape: f32[8], index: 0, kind: input, shape index: {}]
  %s1 = inlined_call_operand.hbm [shape: f32[16,128], index: 1, kind: input, shape index: {}]
  %s2 = inlined_call_operand.hbm [shape: f32[16,128], index: 2, kind: output, shape index: {}]
  %s3 = sld [smem:[#allocation0]]
  $region26: #{tpu_custom_call.1} parent=0
    _
  %s5 = ssub.s32 1, %s3
  %s6 = scalar_select 0, %s5, %s3
  $region1: #{tpu_custom_call.1} parent=0
    #allocation2 [shape = 'u8[512]{0}', space=smem, size = 0x200, scoped, tag = 'input window, operand 0, single buffered']
    #allocation3 [shape = 's32[1]{0}', space=sflag, size = 0x4, scoped, tag = 'scoped memory for tpu_custom_call.1']
    #allocation4 [shape = 's32[1]{0}', space=sflag, size = 0x4, scoped, tag = 'scoped memory for tpu_custom_call.1']
    #allocation5 [shape = 's32[1]{0}', space=sflag, size = 0x4, scoped, tag = 'scoped memory for tpu_custom_call.1']
    #allocation6 [shape = 'u8[8192]{0}', space=vmem, size = 0x2000, scoped, tag = 'input window, operand 1, single buffered']
    #allocation7 [shape = 'u8[8192]{0}', space=vmem, size = 0x2000, scoped, tag = 'output window, operand 0, single buffered']
    %7 = vsyncpa [#allocation5], 0
    %8 = vsyncpa [#allocation3], 0
    %9 = vsyncpa [#allocation4], 0
    // Predicated region
    $region2: #{tpu_custom_call.1} parent=1 // pred_check
      _
    $region3: #{tpu_custom_call.1} parent=1 // pred_check_branch
      %11 = sbr.rel (0) target = $region5
    $region4: #{tpu_custom_call.1} parent=1 // pred_region
      %s13 = ssub.s32 16, 16
      %14 = vsyncadd [#allocation5], %s13
      %17 = dma.hbm_to_smem %s0, 16, [#allocation2], [#allocation5]
    $region5: #{tpu_custom_call.1} parent=1 // pred_fallthru
      _
    // Predicated region
    $region6: #{tpu_custom_call.1} parent=1 // pred_check
      _
    $region7: #{tpu_custom_call.1} parent=1 // pred_check_branch
      %19 = sbr.rel (0) target = $region9
    $region8: #{tpu_custom_call.1} parent=1 // pred_region
      %s21 = ssub.s32 256, 256
      %22 = vsyncadd [#allocation3], %s21
      %s23 = sshll.u32 [#allocation6], 4
      %s24 = int_to_ptr.vmem [resolvable:$true] %s23
      %29 = dma.hbm_to_vmem [thread:$0]  %s1, 256, %s24, [#allocation3], 128, 128, 8
    $region9: #{tpu_custom_call.1} parent=1 // pred_fallthru
      _
    // Predicated region
    $region10: #{tpu_custom_call.1} parent=1 // pred_check
      _
    $region11: #{tpu_custom_call.1} parent=1 // pred_check_branch
      %31 = sbr.rel (0) target = $region13
    $region12: #{tpu_custom_call.1} parent=1 // pred_region
      %32 = dma.done [#allocation5], 16
    $region13: #{tpu_custom_call.1} parent=1 // pred_fallthru
      _
    // Predicated region
    $region14: #{tpu_custom_call.1} parent=1 // pred_check
      _
    $region15: #{tpu_custom_call.1} parent=1 // pred_check_branch
      %34 = sbr.rel (0) target = $region17
    $region16: #{tpu_custom_call.1} parent=1 // pred_region
      %35 = dma.done [#allocation3], 256
    $region17: #{tpu_custom_call.1} parent=1 // pred_fallthru
      _
    %36 = sfence
    %s37 = sld [smem:[#allocation2]]
    %s38 = sld [smem:[#allocation2 + $0x1]]
    %s39 = sld [smem:[#allocation2 + $0x2]]
    %s40 = sld [smem:[#allocation2 + $0x3]]
    %s41 = sld [smem:[#allocation2 + $0x4]]
    %s42 = sld [smem:[#allocation2 + $0x5]]
    %s43 = sld [smem:[#allocation2 + $0x6]]
    %s44 = sld [smem:[#allocation2 + $0x7]]
    %v45 = vld [vmem:[#allocation6] sm:$0xff]
    %v46 = vld [vmem:[#allocation6 + $0x8] sm:$0xff]
    %v47 = vstv %s40
    %v48 = vmul.f32 %v45, %v47
    %v49 = vmul.f32 %v46, %v47
    %v50 = vstv %s39
    %v51 = vadd.f32 %v50, %v48
    %v52 = vadd.f32 %v50, %v49
    %v53 = vmul.f32 %v45, %v51
    %v54 = vmul.f32 %v46, %v52
    %v55 = vstv %s38
    %v56 = vadd.f32 %v55, %v53
    %v57 = vadd.f32 %v55, %v54
    %v58 = vmul.f32 %v45, %v56
    %v59 = vmul.f32 %v46, %v57
    %v60 = vstv %s37
    %v61 = vadd.f32 %v60, %v58
    %v62 = vadd.f32 %v60, %v59
    %v63 = vstv %s44
    %v64 = vmul.f32 %v45, %v63
    %v65 = vmul.f32 %v46, %v63
    %v66 = vstv %s43
    %v67 = vadd.f32 %v66, %v64
    %v68 = vadd.f32 %v66, %v65
    %v69 = vmul.f32 %v45, %v67
    %v70 = vmul.f32 %v46, %v68
    %v71 = vstv %s42
    %v72 = vadd.f32 %v71, %v69
    %v73 = vadd.f32 %v71, %v70
    %v74 = vmul.f32 %v45, %v72
    %v75 = vmul.f32 %v46, %v73
    %v76 = vstv %s41
    %v77 = vadd.f32 %v76, %v74
    %v78 = vadd.f32 %v76, %v75
    %v79 = vmul.f32 %v61, %v77
    %v80 = vmul.f32 %v62, %v78
    %81 = vst [vmem:[#allocation7] sm:$0xff] %v79
    %82 = vst [vmem:[#allocation7 + $0x8] sm:$0xff] %v80
    // Predicated region
    $region18: #{tpu_custom_call.1} parent=1 // pred_check
      _
    $region19: #{tpu_custom_call.1} parent=1 // pred_check_branch
      %84 = sbr.rel (0) target = $region21
    $region20: #{tpu_custom_call.1} parent=1 // pred_region
      %s86 = ssub.s32 256, 256
      %87 = vsyncadd [#allocation4], %s86
      %s88 = sshll.u32 [#allocation7], 4
      %s89 = int_to_ptr.vmem [resolvable:$true] %s88
      %94 = dma.vmem_to_hbm [thread:$0]  %s89, 256, %s2, [#allocation4], 128, 128, 8
    $region21: #{tpu_custom_call.1} parent=1 // pred_fallthru
      _
    // Predicated region
    $region22: #{tpu_custom_call.1} parent=1 // pred_check
      _
    $region23: #{tpu_custom_call.1} parent=1 // pred_check_branch
      %96 = sbr.rel (0) target = $region25
    $region24: #{tpu_custom_call.1} parent=1 // pred_region
      %97 = dma.done [#allocation4], 256
    $region25: #{tpu_custom_call.1} parent=1 // pred_fallthru
      _
    %98 = vsyncpa [#allocation3], 1
    %99 = vsyncpa [#allocation4], 1
    %100 = vsyncpa [#allocation5], 1

</llo_original>
